<compile_context>
chip_gen: v5e
topology: v5e:2x2
jax: 0.10.0
libtpu: 0.0.40
codegen_flags: <defaults>
</compile_context>

<pallas_src>
import jax
import jax.numpy as jnp
from jax.experimental import pallas as pl
from jax.experimental.pallas import tpu as pltpu


def _round_up(x, m):
    return (x + m - 1) // m * m


def tmtf_kernel(b_ref, idx_ref, utab_ref, ittab_ref, o_ref):
    """One grid step = TN examples, lane-dense (examples on the lane axis).

    b_ref     : (1,)              f32 SMEM  global bias b
    idx_ref   : (3, TN)           i32 VMEM  rows: user / item / (n_items + itemage)
    utab_ref  : (R_pad, Vu_pad)   f32 VMEM  augmented, transposed user table (resident)
    ittab_ref : (R_pad, Vit_pad)  f32 VMEM  augmented, transposed [item|time] table (resident)
    o_ref     : (1, TN)           f32 VMEM  predictions for this tile
    """
    tn = o_ref.shape[-1]

    u_ids = idx_ref[0:1, :]           # (1, TN) i32
    i_ids = idx_ref[1:2, :]
    t_ids = idx_ref[2:3, :]           # already offset by n_items on the host

    # user gather: one-hot matmul against the resident user table.
    #   ug[:, n] = u_aug[:, user[n]]            (R_pad, TN), lane-dense
    vu = utab_ref.shape[1]
    u_rows = jax.lax.broadcasted_iota(jnp.int32, (vu, tn), 0)
    u_onehot = jnp.where(u_rows == u_ids, 1.0, 0.0)
    ug = jnp.dot(utab_ref[...], u_onehot,
                 preferred_element_type=jnp.float32,
                 precision=jax.lax.Precision.HIGHEST)

    # fused (item + time) gather: TWO-hot matmul against the concatenated table.
    #   itg[:, n] = i_aug[:, item[n]] + t_aug[:, itemage[n]]
    # item ids < n_items and time ids >= n_items, so the two hots never collide
    # for real examples (padded tail may collide at row 0; it is discarded).
    vit = ittab_ref.shape[1]
    it_rows = jax.lax.broadcasted_iota(jnp.int32, (vit, tn), 0)
    twohot = jnp.where((it_rows == i_ids) | (it_rows == t_ids), 1.0, 0.0)
    itg = jnp.dot(ittab_ref[...], twohot,
                  preferred_element_type=jnp.float32,
                  precision=jax.lax.Precision.HIGHEST)

    # sum_d ug[d]*(itg[d]) == v_u.(v_i+v_t) + b_u + b_i + b_T
    pred = jnp.sum(ug * itg, axis=0, keepdims=True)                  # (1, TN)
    o_ref[...] = pred + b_ref[0]


def build_tmtf_tables(params):
    """FM-style augmentation + concat + transpose + tile padding of the tables.

    Augmented columns (before transpose), positions D..D+1:
        user : [b_u, 1]      item : [1, b_i]      time : [0, b_T]
    so that  sum(u_aug * (i_aug + t_aug)) == v_u.(v_i+v_t) + b_u + b_i + b_T.
    The item and time tables are concatenated along the vocab axis (time rows
    offset by n_items) so one "two-hot" matmul produces i_aug + t_aug.
    Tables are returned transposed to (D+2, V) (examples sit on lanes) and
    zero-padded to (multiple of 8, multiple of 128).
    """
    ue, ie, te = params["user_embedding"], params["item_embedding"], params["time_embedding"]
    bu, bi, bt = params["b_u"], params["b_i"], params["b_T"]
    d = ue.shape[1]
    nu, ni, nt = ue.shape[0], ie.shape[0], te.shape[0]

    u_aug = jnp.concatenate([ue, bu, jnp.ones((nu, 1), jnp.float32)], axis=1)
    i_aug = jnp.concatenate([ie, jnp.ones((ni, 1), jnp.float32), bi], axis=1)
    t_aug = jnp.concatenate([te, jnp.zeros((nt, 1), jnp.float32), bt], axis=1)
    it_aug = jnp.concatenate([i_aug, t_aug], axis=0)        # (n_items + n_periods, D+2)

    r_pad = _round_up(d + 2, 8)

    def prep(a):
        t = a.T                                              # (D+2, V)
        r, v = t.shape
        return jnp.pad(t, ((0, r_pad - r), (0, _round_up(v, 128) - v)))

    return prep(u_aug), prep(it_aug)


def tmtf_forward(params, user, item, itemage, *, tn=256):
    """TMTF forward: pred[n] = v_u.(v_i+v_t) + b + b_u + b_i + b_T  (MSE -> no sigmoid)."""
    assert tn % 128 == 0, "tile width must be a multiple of 128 (lane-dense blocks)"
    utab, ittab = build_tmtf_tables(params)
    n_items = params["item_embedding"].shape[0]

    n = user.shape[0]
    n_pad = _round_up(max(n, 1), tn)

    # One lane-dense id slab: row 0 = user, 1 = item, 2 = n_items + itemage
    # (time ids pre-offset into the concatenated table).  Tail is padded with
    # id 0 (a valid row) and sliced away after the kernel.
    idx = jnp.stack([user.astype(jnp.int32),
                     item.astype(jnp.int32),
                     itemage.astype(jnp.int32) + n_items])            # (3, N)
    idx = jnp.pad(idx, ((0, 0), (0, n_pad - n)))                      # (3, N_pad)

    grid_spec = pltpu.PrefetchScalarGridSpec(
        num_scalar_prefetch=0,
        grid=(n_pad // tn,),
        in_specs=[
            pl.BlockSpec(memory_space=pltpu.MemorySpace.SMEM),        # b (1,) scalar
            pl.BlockSpec((3, tn), lambda i: (0, i)),                  # ids, tiled on lanes
            pl.BlockSpec(utab.shape, lambda i: (0, 0)),               # tables: VMEM-resident
            pl.BlockSpec(ittab.shape, lambda i: (0, 0)),
        ],
        out_specs=pl.BlockSpec((1, tn), lambda i: (0, i)),            # lane-dense output
    )
    out = pl.pallas_call(
        tmtf_kernel,
        out_shape=jax.ShapeDtypeStruct((1, n_pad), jnp.float32),
        grid_spec=grid_spec,
        compiler_params=pltpu.CompilerParams(
            dimension_semantics=("parallel",),                        # megacore on v7x
        ),
    )(params["b"], idx, utab, ittab)
    # self.m is None for MSE loss -> no sigmoid; drop the padded tail.
    return out[0, :n]


def xavier_normal(key, shape):
    fan_out, fan_in = shape[0], shape[1]
    std = (2.0 / (fan_in + fan_out)) ** 0.5
    return std * jax.random.normal(key, shape, dtype=jnp.float32)


def init_params(key, n_users, n_items, n_periods, embedding_size):
    ks = jax.random.split(key, 7)
    return {
        "user_embedding": xavier_normal(ks[0], (n_users, embedding_size)),
        "item_embedding": xavier_normal(ks[1], (n_items, embedding_size)),
        "time_embedding": xavier_normal(ks[2], (n_periods, embedding_size)),
        "b_T": xavier_normal(ks[3], (n_periods, 1)),
        "b_u": xavier_normal(ks[4], (n_users, 1)),
        "b_i": xavier_normal(ks[5], (n_items, 1)),
        # torch.Tensor(1) is left uninitialized in the reference module
        # (the Parameter branch of _init_weights never fires); use a fixed value.
        "b": jnp.full((1,), 0.1, dtype=jnp.float32),
    }


if __name__ == "__main__":
    key = jax.random.PRNGKey(0)
    kp, ku, ki, kt = jax.random.split(key, 4)

    n_users, n_items, n_periods, embedding_size = 40, 50, 12, 32
    N = 300  # batch of (user, item, itemage) triples; deliberately not a tile multiple

    params = init_params(kp, n_users, n_items, n_periods, embedding_size)
    user = jax.random.randint(ku, (N,), 0, n_users, dtype=jnp.int32)
    item = jax.random.randint(ki, (N,), 0, n_items, dtype=jnp.int32)
    itemage = jax.random.randint(kt, (N,), 0, n_periods, dtype=jnp.int32)

    # tn=128 -> 3 grid steps with a ragged tail, exercising tiling + padding.
    pred = jax.block_until_ready(tmtf_forward(params, user, item, itemage, tn=128))

    # pure-JAX reference to sanity-check semantics
    ue = params["user_embedding"][user]
    ie = params["item_embedding"][item]
    te = params["time_embedding"][itemage]
    ref = (jnp.sum(ue * (te + ie), axis=-1)
           + params["b"][0]
           + params["b_u"][user, 0]
           + params["b_i"][item, 0]
           + params["b_T"][itemage, 0])
    assert pred.shape == (N,) and pred.dtype == jnp.float32
    assert jnp.allclose(pred, ref, atol=1e-5, rtol=1e-5)
    print("KERNEL_OK")
</pallas_src>

<mosaic_0001>
module attributes {stable_mosaic.version = 11 : i64} {
  func.func @tmtf_kernel(%arg0: i32, %arg1: memref<1xf32, #tpu.memory_space<smem>>, %arg2: memref<3x128xi32, #tpu.memory_space<vmem>>, %arg3: memref<40x128xf32, #tpu.memory_space<vmem>>, %arg4: memref<40x128xf32, #tpu.memory_space<vmem>>, %arg5: memref<1x128xf32, #tpu.memory_space<vmem>>) attributes {dimension_semantics = [#tpu.dimension_semantics<parallel>], iteration_bounds = array<i64: 3>, scalar_prefetch = 0 : i64, scratch_operands = 0 : i64, tpu.core_type = #tpu.core_type<tc>, window_params = [{transform_indices = @transform_0, window_bounds = array<i64: 1>}, {transform_indices = @transform_1, window_bounds = array<i64: 3, 128>}, {pipeline_mode = #tpu.pipeline_mode<synchronous>, transform_indices = @transform_2, window_bounds = array<i64: 40, 128>}, {pipeline_mode = #tpu.pipeline_mode<synchronous>, transform_indices = @transform_3, window_bounds = array<i64: 40, 128>}, {transform_indices = @transform_4, window_bounds = array<i64: 1, 128>}]} {
    %c0 = arith.constant 0 : index
    %c0_0 = arith.constant 0 : index
    %0 = vector.load %arg2[%c0, %c0_0] : memref<3x128xi32, #tpu.memory_space<vmem>>, vector<1x128xi32>
    %c1 = arith.constant 1 : index
    %c0_1 = arith.constant 0 : index
    %1 = vector.load %arg2[%c1, %c0_1] : memref<3x128xi32, #tpu.memory_space<vmem>>, vector<1x128xi32>
    %c2 = arith.constant 2 : index
    %c0_2 = arith.constant 0 : index
    %2 = vector.load %arg2[%c2, %c0_2] : memref<3x128xi32, #tpu.memory_space<vmem>>, vector<1x128xi32>
    %3 = tpu.iota {dimensions = array<i32: 0>} : vector<128x128xi32>
    %4 = vector.broadcast %0 : vector<1x128xi32> to vector<128x128xi32>
    %5 = arith.cmpi eq, %3, %4 : vector<128x128xi32>
    %cst = arith.constant 1.000000e+00 : f32
    %cst_3 = arith.constant 0.000000e+00 : f32
    %6 = vector.broadcast %cst : f32 to vector<128x128xf32>
    %7 = vector.broadcast %cst_3 : f32 to vector<128x128xf32>
    %8 = arith.select %5, %6, %7 : vector<128x128xi1>, vector<128x128xf32>
    %c0_4 = arith.constant 0 : index
    %c0_5 = arith.constant 0 : index
    %9 = vector.load %arg3[%c0_4, %c0_5] : memref<40x128xf32, #tpu.memory_space<vmem>>, vector<40x128xf32>
    %cst_6 = arith.constant dense<0.000000e+00> : vector<40x128xf32>
    %10 = tpu.matmul %9, %8, %cst_6 {dimension_numbers = #tpu.dot_dimension_numbers<[1], [0], [0], [1], [0, 0, 1, 1], [], []>, precision = #tpu.contract_precision<fp32>} : vector<40x128xf32>, vector<128x128xf32>, vector<40x128xf32> -> vector<40x128xf32>
    %11 = tpu.iota {dimensions = array<i32: 0>} : vector<128x128xi32>
    %12 = vector.broadcast %1 : vector<1x128xi32> to vector<128x128xi32>
    %13 = arith.cmpi eq, %11, %12 : vector<128x128xi32>
    %14 = vector.broadcast %2 : vector<1x128xi32> to vector<128x128xi32>
    %15 = arith.cmpi eq, %11, %14 : vector<128x128xi32>
    %16 = arith.ori %13, %15 : vector<128x128xi1>
    %cst_7 = arith.constant 1.000000e+00 : f32
    %cst_8 = arith.constant 0.000000e+00 : f32
    %17 = vector.broadcast %cst_7 : f32 to vector<128x128xf32>
    %18 = vector.broadcast %cst_8 : f32 to vector<128x128xf32>
    %19 = arith.select %16, %17, %18 : vector<128x128xi1>, vector<128x128xf32>
    %c0_9 = arith.constant 0 : index
    %c0_10 = arith.constant 0 : index
    %20 = vector.load %arg4[%c0_9, %c0_10] : memref<40x128xf32, #tpu.memory_space<vmem>>, vector<40x128xf32>
    %cst_11 = arith.constant dense<0.000000e+00> : vector<40x128xf32>
    %21 = tpu.matmul %20, %19, %cst_11 {dimension_numbers = #tpu.dot_dimension_numbers<[1], [0], [0], [1], [0, 0, 1, 1], [], []>, precision = #tpu.contract_precision<fp32>} : vector<40x128xf32>, vector<128x128xf32>, vector<40x128xf32> -> vector<40x128xf32>
    %22 = arith.mulf %10, %21 : vector<40x128xf32>
    %cst_12 = arith.constant dense<0.000000e+00> : vector<128xf32>
    %23 = vector.multi_reduction <add>, %22, %cst_12 [0] : vector<40x128xf32> to vector<128xf32>
    %24 = vector.shape_cast %23 : vector<128xf32> to vector<1x128xf32>
    %c0_13 = arith.constant 0 : index
    %25 = memref.load %arg1[%c0_13] : memref<1xf32, #tpu.memory_space<smem>>
    %26 = vector.broadcast %25 : f32 to vector<1x128xf32>
    %27 = arith.addf %24, %26 : vector<1x128xf32>
    %c0_14 = arith.constant 0 : index
    %c0_15 = arith.constant 0 : index
    %28 = vector.load %arg5[%c0_14, %c0_15] : memref<1x128xf32, #tpu.memory_space<vmem>>, vector<1x128xf32>
    tpu.vector_store %arg5[%c0_14, %c0_15], %27 {strides = array<i32>} : memref<1x128xf32, #tpu.memory_space<vmem>>, vector<1x128xf32>,
    return
  }
  func.func @transform_0(%arg0: i32) -> i32 {
    %c0_i32 = arith.constant 0 : i32
    %c0_i32_0 = arith.constant 0 : i32
    return %c0_i32 : i32
  }
  func.func @transform_1(%arg0: i32) -> (i32, i32) {
    %c0_i32 = arith.constant 0 : i32
    %c0_i32_0 = arith.constant 0 : i32
    return %c0_i32, %arg0 : i32, i32
  }
  func.func @transform_2(%arg0: i32) -> (i32, i32) {
    %c0_i32 = arith.constant 0 : i32
    %c0_i32_0 = arith.constant 0 : i32
    %c0_i32_1 = arith.constant 0 : i32
    return %c0_i32, %c0_i32_0 : i32, i32
  }
  func.func @transform_3(%arg0: i32) -> (i32, i32) {
    %c0_i32 = arith.constant 0 : i32
    %c0_i32_0 = arith.constant 0 : i32
    %c0_i32_1 = arith.constant 0 : i32
    return %c0_i32, %c0_i32_0 : i32, i32
  }
  func.func @transform_4(%arg0: i32) -> (i32, i32) {
    %c0_i32 = arith.constant 0 : i32
    %c0_i32_0 = arith.constant 0 : i32
    return %c0_i32, %arg0 : i32, i32
  }
}

</mosaic_0001>

<llo_original>
// kernel: tpu_custom_call.1
$region0: #{tpu_custom_call.1}
  #allocation0 [shape = 'u32[]', space=smem, size = 0x4, offset = 0x4, fixed_abs, tag = 'smem constant byte address 0x4 - core index']
  #allocation1 [shape = 'u32[72,128]{1,0:T(1,128)}', space=vmem, size = 0x9000, scoped, tag = 'internal scratch']
  #allocation2 [shape = 'f32[1]{0:T(128)S(6)}', space=smem, size = 0x200, scoped, tag = 'scoped memory for tpu_custom_call.1']
  %s0 = inlined_call_operand.<no memory space> [shape: f32[1], index: 0, kind: input, shape index: {}]
  %s1 = inlined_call_operand.hbm [shape: s32[3,384], index: 1, kind: input, shape index: {}]
  %s2 = inlined_call_operand.hbm [shape: f32[40,128], index: 2, kind: input, shape index: {}]
  %s3 = inlined_call_operand.hbm [shape: f32[40,128], index: 3, kind: input, shape index: {}]
  %s4 = inlined_call_operand.hbm [shape: f32[1,384], index: 4, kind: output, shape index: {}]
  %s5 = sld [smem:[#allocation0]]
  $region61: #{tpu_custom_call.1} parent=0
    _
  %s7 = ssub.s32 1, %s5
  %s8 = scalar_select 0, %s7, %s5
  %9 = sst [smem:[#allocation2]] %s0
  $region1: #{tpu_custom_call.1} parent=0
    #allocation3 [shape = 'u8[4096]{0}', space=vmem, size = 0x1000, scoped, tag = 'input window, operand 1']
    #allocation4 [shape = 's32[2]{0}', space=sflag, size = 0x8, scoped, tag = 'scoped memory for tpu_custom_call.1']
    #allocation5 [shape = 's32[2]{0}', space=sflag, size = 0x8, scoped, tag = 'scoped memory for tpu_custom_call.1']
    #allocation6 [shape = 'u8[20480]{0}', space=vmem, size = 0x5000, scoped, tag = 'input window, operand 2, single buffered']
    #allocation7 [shape = 's32[1]{0}', space=sflag, size = 0x4, scoped, tag = 'scoped memory for tpu_custom_call.1']
    #allocation8 [shape = 'u8[20480]{0}', space=vmem, size = 0x5000, scoped, tag = 'input window, operand 3, single buffered']
    #allocation9 [shape = 'u8[1024]{0}', space=vmem, size = 0x400, scoped, tag = 'output window, operand 0']
    %10 = vsyncpa [#allocation4], 0
    %s11 = scalar_lea.sflag [#allocation4], 1
    %12 = vsyncpa %s11, 0
    %13 = vsyncpa [#allocation7], 0
    %14 = vsyncpa [#allocation5], 0
    %s15 = scalar_lea.sflag [#allocation5], 1
    %16 = vsyncpa %s15, 0
    loop: start=0, step=1, limit=5
    $region2: #{tpu_custom_call.1} parent=1 // loop_pre_header
      _
    $region3: #{tpu_custom_call.1} parent=1 // loop_header
      %s18 = sphi 0, %s22
      %p19 = scmp.ge.s32.totalorder %s18, 5
      %s26 = sphi 0, %s26
      %s28 = sphi 0, %s26
      %s29 = sphi 0, %s28
      %s43 = sphi 0, %s29
      %s49 = sphi 0, %s51
      %s52 = sphi 0, %s49
      %s53 = sphi 0, %s52
      %s69 = sphi 0, %s53
      %s73 = sphi 0, %s73
      %s75 = sphi 0, %s73
      %s76 = sphi 0, %s75
      %s90 = sphi 0, %s76
      %s94 = sphi 0, %s94
      %s96 = sphi 0, %s94
      %s97 = sphi 0, %s96
      %s111 = sphi 0, %s97
      %s117 = sphi 0, %s119
      %s120 = sphi 0, %s117
      %s121 = sphi 0, %s120
      %s137 = sphi 0, %s121
    $region4: #{tpu_custom_call.1} parent=1 // loop_header_branch
      %21 = sbr.rel (%p19) target = $region8
    $region5: #{tpu_custom_call.1} parent=1 // loop_body
      %s23 = ssub.s32 %s18, 1
      %s24 = ssub.s32 %s18, 2
      %s25 = sadd.s32 %s18, 1
      %s27 = sadd.s32 %s26, 1
      %p30 = scmp.eq.s32.totalorder %s18, 2
      %p31 = scmp.ne.s32.totalorder %s26, %s28
      %p32 = scmp.eq.s32.totalorder %s18, 0
      %p33 = por %p31, %p32
      %p34 = scmp.ne.s32.totalorder %s26, %s28
      %p35 = scmp.eq.s32.totalorder %s23, 2
      %p36 = por %p34, %p35
      %p37 = scmp.ne.s32.totalorder %s28, %s29
      %p38 = scmp.eq.s32.totalorder %s23, 0
      %p39 = por %p37, %p38
      %p40 = scmp.ne.s32.totalorder %s28, %s29
      %p41 = scmp.eq.s32.totalorder %s24, 2
      %p42 = por %p40, %p41
      %p44 = scmp.ne.s32.totalorder %s29, %s43
      %p45 = scmp.eq.s32.totalorder %s24, 0
      %p46 = por %p44, %p45
      %s47 = ssub.s32 %s18, %s25
      %p48 = scmp.eq.s32.totalorder %s47, 0
      %s50 = sadd.s32 %s49, 1
      %s51 = scalar_select %p48, %s49, %s50
      %p54 = pneg %p48
      %p55 = scmp.eq.s32.totalorder %s18, 2
      %p56 = por %p54, %p55
      %p57 = scmp.ne.s32.totalorder %s49, %s52
      %p58 = scmp.eq.s32.totalorder %s18, 0
      %p59 = por %p57, %p58
      %p60 = scmp.ne.s32.totalorder %s49, %s52
      %p61 = scmp.eq.s32.totalorder %s23, 2
      %p62 = por %p60, %p61
      %p63 = scmp.ne.s32.totalorder %s52, %s53
      %p64 = scmp.eq.s32.totalorder %s23, 0
      %p65 = por %p63, %p64
      %p66 = scmp.ne.s32.totalorder %s52, %s53
      %p67 = scmp.eq.s32.totalorder %s24, 2
      %p68 = por %p66, %p67
      %p70 = scmp.ne.s32.totalorder %s53, %s69
      %p71 = scmp.eq.s32.totalorder %s24, 0
      %p72 = por %p70, %p71
      %s74 = sadd.s32 %s73, 1
      %p77 = scmp.eq.s32.totalorder %s18, 2
      %p78 = scmp.ne.s32.totalorder %s73, %s75
      %p79 = scmp.eq.s32.totalorder %s18, 0
      %p80 = por %p78, %p79
      %p81 = scmp.ne.s32.totalorder %s73, %s75
      %p82 = scmp.eq.s32.totalorder %s23, 2
      %p83 = por %p81, %p82
      %p84 = scmp.ne.s32.totalorder %s75, %s76
      %p85 = scmp.eq.s32.totalorder %s23, 0
      %p86 = por %p84, %p85
      %p87 = scmp.ne.s32.totalorder %s75, %s76
      %p88 = scmp.eq.s32.totalorder %s24, 2
      %p89 = por %p87, %p88
      %p91 = scmp.ne.s32.totalorder %s76, %s90
      %p92 = scmp.eq.s32.totalorder %s24, 0
      %p93 = por %p91, %p92
      %s95 = sadd.s32 %s94, 1
      %p98 = scmp.eq.s32.totalorder %s18, 2
      %p99 = scmp.ne.s32.totalorder %s94, %s96
      %p100 = scmp.eq.s32.totalorder %s18, 0
      %p101 = por %p99, %p100
      %p102 = scmp.ne.s32.totalorder %s94, %s96
      %p103 = scmp.eq.s32.totalorder %s23, 2
      %p104 = por %p102, %p103
      %p105 = scmp.ne.s32.totalorder %s96, %s97
      %p106 = scmp.eq.s32.totalorder %s23, 0
      %p107 = por %p105, %p106
      %p108 = scmp.ne.s32.totalorder %s96, %s97
      %p109 = scmp.eq.s32.totalorder %s24, 2
      %p110 = por %p108, %p109
      %p112 = scmp.ne.s32.totalorder %s97, %s111
      %p113 = scmp.eq.s32.totalorder %s24, 0
      %p114 = por %p112, %p113
      %s115 = ssub.s32 %s18, %s25
      %p116 = scmp.eq.s32.totalorder %s115, 0
      %s118 = sadd.s32 %s117, 1
      %s119 = scalar_select %p116, %s117, %s118
      %p122 = pneg %p116
      %p123 = scmp.eq.s32.totalorder %s18, 2
      %p124 = por %p122, %p123
      %p125 = scmp.ne.s32.totalorder %s117, %s120
      %p126 = scmp.eq.s32.totalorder %s18, 0
      %p127 = por %p125, %p126
      %p128 = scmp.ne.s32.totalorder %s117, %s120
      %p129 = scmp.eq.s32.totalorder %s23, 2
      %p130 = por %p128, %p129
      %p131 = scmp.ne.s32.totalorder %s120, %s121
      %p132 = scmp.eq.s32.totalorder %s23, 0
      %p133 = por %p131, %p132
      %p134 = scmp.ne.s32.totalorder %s120, %s121
      %p135 = scmp.eq.s32.totalorder %s24, 2
      %p136 = por %p134, %p135
      %p138 = scmp.ne.s32.totalorder %s121, %s137
      %p139 = scmp.eq.s32.totalorder %s24, 0
      %p140 = por %p138, %p139
      %p141 = scmp.le.s32.totalorder 1, %s18
      %p142 = scmp.lt.s32.totalorder %s18, 4
      %p143 = pnand %p141, %p142
      %p144 = pneg %p143
      // Predicated region
      $region9: #{tpu_custom_call.1} parent=5 // pred_check
        _
      $region10: #{tpu_custom_call.1} parent=5 // pred_check_branch
        %146 = sbr.rel (%p143) target = $region12
      $region11: #{tpu_custom_call.1} parent=5 // pred_region
        %s147 = ssub.s32 %s18, 1
        // Predicated region
        $region13: #{tpu_custom_call.1} parent=11 // pred_check
          %p148 = pneg %p39
        $region14: #{tpu_custom_call.1} parent=11 // pred_check_branch
          %150 = sbr.rel (%p148) target = $region16
        $region15: #{tpu_custom_call.1} parent=11 // pred_region
          _
        $region16: #{tpu_custom_call.1} parent=11 // pred_fallthru
          _
        // Predicated region
        $region17: #{tpu_custom_call.1} parent=11 // pred_check
          %p151 = pneg %p86
        $region18: #{tpu_custom_call.1} parent=11 // pred_check_branch
          %153 = sbr.rel (%p151) target = $region20
        $region19: #{tpu_custom_call.1} parent=11 // pred_region
          %155 = vsyncadd [#allocation7], 0
          %s156 = sshll.u32 %s2, 4
          %s157 = int_to_ptr.hbm [resolvable:$true] %s156
          %s158 = sshll.u32 [#allocation6], 4
          %s159 = int_to_ptr.vmem [resolvable:$true] %s158
          %164 = dma.hbm_to_vmem [thread:$0]  %s157, 640, %s159, [#allocation7], 128, 128, 8
        $region20: #{tpu_custom_call.1} parent=11 // pred_fallthru
          _
        // Predicated region
        $region21: #{tpu_custom_call.1} parent=11 // pred_check
          %p165 = pneg %p107
        $region22: #{tpu_custom_call.1} parent=11 // pred_check_branch
          %167 = sbr.rel (%p165) target = $region24
        $region23: #{tpu_custom_call.1} parent=11 // pred_region
          %169 = vsyncadd [#allocation7], 0
          %s170 = sshll.u32 %s3, 4
          %s171 = int_to_ptr.hbm [resolvable:$true] %s170
          %s172 = sshll.u32 [#allocation8], 4
          %s173 = int_to_ptr.vmem [resolvable:$true] %s172
          %178 = dma.hbm_to_vmem [thread:$0]  %s171, 640, %s173, [#allocation7], 128, 128, 8
        $region24: #{tpu_custom_call.1} parent=11 // pred_fallthru
          _
      $region12: #{tpu_custom_call.1} parent=5 // pred_fallthru
        _
      %p179 = scmp.lt.s32.totalorder %s18, 3
      // Predicated region
      $region25: #{tpu_custom_call.1} parent=5 // pred_check
        %p180 = pneg %p179
      $region26: #{tpu_custom_call.1} parent=5 // pred_check_branch
        %182 = sbr.rel (%p180) target = $region28
      $region27: #{tpu_custom_call.1} parent=5 // pred_region
        // Predicated region
        $region29: #{tpu_custom_call.1} parent=27 // pred_check
          %p183 = pneg %p59
        $region30: #{tpu_custom_call.1} parent=27 // pred_check_branch
          %185 = sbr.rel (%p183) target = $region32
        $region31: #{tpu_custom_call.1} parent=27 // pred_region
          %s186 = sand.u32 %s49, 1
          %s187 = scalar_lea.sflag [#allocation4], %s186
          %s188 = sand.u32 %s49, 1
          %s189 = smul.addr %s188, 4
          %s190 = scalar_lea.vmem [#allocation3], %s189
          %192 = vsyncadd %s187, 0
          %s193 = smul.addr %s18, 4
          %s194 = scalar_lea.hbm %s1, %s193
          %s196 = sshll.u32 %s194, 4
          %s197 = int_to_ptr.hbm [resolvable:$true] %s196
          %s198 = sshll.u32 %s190, 4
          %s199 = int_to_ptr.vmem [resolvable:$true] %s198
          %201 = dma.hbm_to_vmem [thread:$0]  %s197, 64, %s199, %s187
        $region32: #{tpu_custom_call.1} parent=27 // pred_fallthru
          _
      $region28: #{tpu_custom_call.1} parent=5 // pred_fallthru
        _
      %p202 = scmp.le.s32.totalorder 1, %s18
      %p203 = scmp.lt.s32.totalorder %s18, 4
      %p204 = pnand %p202, %p203
      %p205 = pneg %p204
      // Predicated region
      $region33: #{tpu_custom_call.1} parent=5 // pred_check
        _
      $region34: #{tpu_custom_call.1} parent=5 // pred_check_branch
        %207 = sbr.rel (%p204) target = $region36
      $region35: #{tpu_custom_call.1} parent=5 // pred_region
        %s208 = ssub.s32 %s18, 1
        %s209 = sand.u32 %s52, 1
        %s210 = scalar_lea.sflag [#allocation4], %s209
        %s211 = sand.u32 %s52, 1
        %s212 = smul.addr %s211, 4
        %s213 = scalar_lea.vmem [#allocation3], %s212
        // Predicated region
        $region37: #{tpu_custom_call.1} parent=35 // pred_check
          %p214 = pneg %p65
        $region38: #{tpu_custom_call.1} parent=35 // pred_check_branch
          %216 = sbr.rel (%p214) target = $region40
        $region39: #{tpu_custom_call.1} parent=35 // pred_region
          %218 = dma.done %s210, 64
        $region40: #{tpu_custom_call.1} parent=35 // pred_fallthru
          _
        // Predicated region
        $region41: #{tpu_custom_call.1} parent=35 // pred_check
          %p219 = pneg %p86
        $region42: #{tpu_custom_call.1} parent=35 // pred_check_branch
          %221 = sbr.rel (%p219) target = $region44
        $region43: #{tpu_custom_call.1} parent=35 // pred_region
          %223 = dma.done [#allocation7], 640
        $region44: #{tpu_custom_call.1} parent=35 // pred_fallthru
          _
        // Predicated region
        $region45: #{tpu_custom_call.1} parent=35 // pred_check
          %p224 = pneg %p107
        $region46: #{tpu_custom_call.1} parent=35 // pred_check_branch
          %226 = sbr.rel (%p224) target = $region48
        $region47: #{tpu_custom_call.1} parent=35 // pred_region
          %228 = dma.done [#allocation7], 640
        $region48: #{tpu_custom_call.1} parent=35 // pred_fallthru
          _
        %p229 = pneg %p39
        %p230 = pneg %p36
        %s231 = sand.u32 %s52, 1
        %s232 = scalar_lea.sflag [#allocation4], %s231
        %s233 = sand.u32 %s52, 1
        %s234 = smul.addr %s233, 4
        %s235 = scalar_lea.vmem [#allocation3], %s234
        %p236 = pneg %p65
        %p237 = pneg %p62
        %p238 = pneg %p86
        %p239 = pneg %p83
        %p240 = pneg %p107
        %p241 = pneg %p104
        %p242 = pneg %p133
        %p243 = pneg %p130
        %s244 = sand.u32 %s120, 1
        %s245 = scalar_lea.sflag [#allocation5], %s244
        %s246 = sand.u32 %s120, 1
        %s247 = scalar_lea.vmem [#allocation9], %s246
        %v248 = vld [vmem:[%s213] sm:$0x1]
        %v249 = vld [vmem:[%s213 + $0x1] sm:$0x1]
        %v250 = vld [vmem:[%s213 + $0x2] sm:$0x1]
        %v251 = vlaneseq
        %v252 = vshrl.u32 %v251, 7
        %v253 = vadd.s32 %v252, 8
        %v254 = vadd.s32 %v252, 16
        %v255 = vadd.s32 %v252, 24
        %v256 = vadd.s32 %v252, 32
        %v257 = vadd.s32 %v252, 40
        %v258 = vadd.s32 %v252, 48
        %v259 = vadd.s32 %v252, 56
        %v260 = vadd.s32 %v252, 64
        %v261 = vadd.s32 %v252, 72
        %v262 = vadd.s32 %v252, 80
        %v263 = vadd.s32 %v252, 88
        %v264 = vadd.s32 %v252, 96
        %v265 = vadd.s32 %v252, 104
        %v266 = vadd.s32 %v252, 112
        %v267 = vadd.s32 %v252, 120
        %v268 = vperm.slane %v248, 0
        %vm269 = vcmp.eq.s32.totalorder %v252, %v268
        %vm270 = vcmp.eq.s32.totalorder %v253, %v268
        %vm271 = vcmp.eq.s32.totalorder %v254, %v268
        %vm272 = vcmp.eq.s32.totalorder %v255, %v268
        %vm273 = vcmp.eq.s32.totalorder %v256, %v268
        %vm274 = vcmp.eq.s32.totalorder %v257, %v268
        %vm275 = vcmp.eq.s32.totalorder %v258, %v268
        %vm276 = vcmp.eq.s32.totalorder %v259, %v268
        %vm277 = vcmp.eq.s32.totalorder %v260, %v268
        %vm278 = vcmp.eq.s32.totalorder %v261, %v268
        %vm279 = vcmp.eq.s32.totalorder %v262, %v268
        %vm280 = vcmp.eq.s32.totalorder %v263, %v268
        %vm281 = vcmp.eq.s32.totalorder %v264, %v268
        %vm282 = vcmp.eq.s32.totalorder %v265, %v268
        %vm283 = vcmp.eq.s32.totalorder %v266, %v268
        %vm284 = vcmp.eq.s32.totalorder %v267, %v268
        %v285 = vsel %vm269, 1.0, 0.0
        %v286 = vsel %vm270, 1.0, 0.0
        %v287 = vsel %vm271, 1.0, 0.0
        %v288 = vsel %vm272, 1.0, 0.0
        %v289 = vsel %vm273, 1.0, 0.0
        %v290 = vsel %vm274, 1.0, 0.0
        %v291 = vsel %vm275, 1.0, 0.0
        %v292 = vsel %vm276, 1.0, 0.0
        %v293 = vsel %vm277, 1.0, 0.0
        %v294 = vsel %vm278, 1.0, 0.0
        %v295 = vsel %vm279, 1.0, 0.0
        %v296 = vsel %vm280, 1.0, 0.0
        %v297 = vsel %vm281, 1.0, 0.0
        %v298 = vsel %vm282, 1.0, 0.0
        %v299 = vsel %vm283, 1.0, 0.0
        %v300 = vsel %vm284, 1.0, 0.0
        %v301 = vld [vmem:[#allocation6] sm:$0xff]
        %v302 = vld [vmem:[#allocation6 + $0x8] sm:$0xff]
        %v303 = vld [vmem:[#allocation6 + $0x10] sm:$0xff]
        %v304 = vld [vmem:[#allocation6 + $0x18] sm:$0xff]
        %v305 = vld [vmem:[#allocation6 + $0x20] sm:$0xff]
        %306 = vmatpush.msra.mxu0 %v300
        %307 = vmatpush.msra.mxu0 %v299
        %308 = vmatpush.msra.mxu0 %v298
        %309 = vmatpush.msra.mxu0 %v297
        %310 = vmatpush.msra.mxu0 %v296
        %311 = vmatpush.msra.mxu0 %v295
        %312 = vmatpush.msra.mxu0 %v294
        %313 = vmatpush.msra.mxu0 %v293
        %314 = vmatpush.msra.mxu0 %v292
        %315 = vmatpush.msra.mxu0 %v291
        %316 = vmatpush.msra.mxu0 %v290
        %317 = vmatpush.msra.mxu0 %v289
        %318 = vmatpush.msra.mxu0 %v288
        %319 = vmatpush.msra.mxu0 %v287
        %320 = vmatpush.msra.mxu0 %v286
        %321 = vmatpush.msra.mxu0 %v285
        %v322 = vand.u32 %v301, 4294901760
        %v323 = vsub.f32 %v301, %v322
        %v324 = vand.u32 %v323, 4294901760
        %v325 = vsub.f32 %v323, %v324
        %v326 = vand.u32 %v325, 4294901760
        %327 = vmatmul.f32.gmra.mxu0 %v326
        %v328 = vpop.f32.mrf.mxu0
        %v329 = vadd.f32 0.0, %v328
        %v330 = vand.u32 %v302, 4294901760
        %v331 = vsub.f32 %v302, %v330
        %v332 = vand.u32 %v331, 4294901760
        %v333 = vsub.f32 %v331, %v332
        %v334 = vand.u32 %v333, 4294901760
        %335 = vmatmul.f32.gmra.mxu0 %v334
        %v336 = vpop.f32.mrf.mxu0
        %v337 = vadd.f32 0.0, %v336
        %v338 = vand.u32 %v303, 4294901760
        %v339 = vsub.f32 %v303, %v338
        %v340 = vand.u32 %v339, 4294901760
        %v341 = vsub.f32 %v339, %v340
        %v342 = vand.u32 %v341, 4294901760
        %343 = vmatmul.f32.gmra.mxu0 %v342
        %v344 = vpop.f32.mrf.mxu0
        %v345 = vadd.f32 0.0, %v344
        %v346 = vand.u32 %v304, 4294901760
        %v347 = vsub.f32 %v304, %v346
        %v348 = vand.u32 %v347, 4294901760
        %v349 = vsub.f32 %v347, %v348
        %v350 = vand.u32 %v349, 4294901760
        %351 = vmatmul.f32.gmra.mxu0 %v350
        %v352 = vpop.f32.mrf.mxu0
        %v353 = vadd.f32 0.0, %v352
        %v354 = vand.u32 %v305, 4294901760
        %v355 = vsub.f32 %v305, %v354
        %v356 = vand.u32 %v355, 4294901760
        %v357 = vsub.f32 %v355, %v356
        %v358 = vand.u32 %v357, 4294901760
        %359 = vmatmul.f32.gmra.mxu0 %v358
        %v360 = vpop.f32.mrf.mxu0
        %v361 = vadd.f32 0.0, %v360
        %362 = vdwg.mxu0
        %v363 = vsub.f32 %v300, %v300
        %v364 = vand.u32 %v363, 4294901760
        %v365 = vsub.f32 %v363, %v364
        %v366 = vand.u32 %v365, 4294901760
        %367 = vmatpush.msra.mxu0 %v366
        %v368 = vsub.f32 %v299, %v299
        %v369 = vand.u32 %v368, 4294901760
        %v370 = vsub.f32 %v368, %v369
        %v371 = vand.u32 %v370, 4294901760
        %372 = vmatpush.msra.mxu0 %v371
        %v373 = vsub.f32 %v298, %v298
        %v374 = vand.u32 %v373, 4294901760
        %v375 = vsub.f32 %v373, %v374
        %v376 = vand.u32 %v375, 4294901760
        %377 = vmatpush.msra.mxu0 %v376
        %v378 = vsub.f32 %v297, %v297
        %v379 = vand.u32 %v378, 4294901760
        %v380 = vsub.f32 %v378, %v379
        %v381 = vand.u32 %v380, 4294901760
        %382 = vmatpush.msra.mxu0 %v381
        %v383 = vsub.f32 %v296, %v296
        %v384 = vand.u32 %v383, 4294901760
        %v385 = vsub.f32 %v383, %v384
        %v386 = vand.u32 %v385, 4294901760
        %387 = vmatpush.msra.mxu0 %v386
        %v388 = vsub.f32 %v295, %v295
        %v389 = vand.u32 %v388, 4294901760
        %v390 = vsub.f32 %v388, %v389
        %v391 = vand.u32 %v390, 4294901760
        %392 = vmatpush.msra.mxu0 %v391
        %v393 = vsub.f32 %v294, %v294
        %v394 = vand.u32 %v393, 4294901760
        %v395 = vsub.f32 %v393, %v394
        %v396 = vand.u32 %v395, 4294901760
        %397 = vmatpush.msra.mxu0 %v396
        %v398 = vsub.f32 %v293, %v293
        %v399 = vand.u32 %v398, 4294901760
        %v400 = vsub.f32 %v398, %v399
        %v401 = vand.u32 %v400, 4294901760
        %402 = vmatpush.msra.mxu0 %v401
        %v403 = vsub.f32 %v292, %v292
        %v404 = vand.u32 %v403, 4294901760
        %v405 = vsub.f32 %v403, %v404
        %v406 = vand.u32 %v405, 4294901760
        %407 = vmatpush.msra.mxu0 %v406
        %v408 = vsub.f32 %v291, %v291
        %v409 = vand.u32 %v408, 4294901760
        %v410 = vsub.f32 %v408, %v409
        %v411 = vand.u32 %v410, 4294901760
        %412 = vmatpush.msra.mxu0 %v411
        %v413 = vsub.f32 %v290, %v290
        %v414 = vand.u32 %v413, 4294901760
        %v415 = vsub.f32 %v413, %v414
        %v416 = vand.u32 %v415, 4294901760
        %417 = vmatpush.msra.mxu0 %v416
        %v418 = vsub.f32 %v289, %v289
        %v419 = vand.u32 %v418, 4294901760
        %v420 = vsub.f32 %v418, %v419
        %v421 = vand.u32 %v420, 4294901760
        %422 = vmatpush.msra.mxu0 %v421
        %v423 = vsub.f32 %v288, %v288
        %v424 = vand.u32 %v423, 4294901760
        %v425 = vsub.f32 %v423, %v424
        %v426 = vand.u32 %v425, 4294901760
        %427 = vmatpush.msra.mxu0 %v426
        %v428 = vsub.f32 %v287, %v287
        %v429 = vand.u32 %v428, 4294901760
        %v430 = vsub.f32 %v428, %v429
        %v431 = vand.u32 %v430, 4294901760
        %432 = vmatpush.msra.mxu0 %v431
        %v433 = vsub.f32 %v286, %v286
        %v434 = vand.u32 %v433, 4294901760
        %v435 = vsub.f32 %v433, %v434
        %v436 = vand.u32 %v435, 4294901760
        %437 = vmatpush.msra.mxu0 %v436
        %v438 = vsub.f32 %v285, %v285
        %v439 = vand.u32 %v438, 4294901760
        %v440 = vsub.f32 %v438, %v439
        %v441 = vand.u32 %v440, 4294901760
        %442 = vmatpush.msra.mxu0 %v441
        %v443 = vand.u32 %v301, 4294901760
        %444 = vmatmul.f32.gmra.mxu0 %v443
        %v445 = vpop.f32.mrf.mxu0
        %v446 = vadd.f32 %v329, %v445
        %v447 = vand.u32 %v302, 4294901760
        %448 = vmatmul.f32.gmra.mxu0 %v447
        %v449 = vpop.f32.mrf.mxu0
        %v450 = vadd.f32 %v337, %v449
        %v451 = vand.u32 %v303, 4294901760
        %452 = vmatmul.f32.gmra.mxu0 %v451
        %v453 = vpop.f32.mrf.mxu0
        %v454 = vadd.f32 %v345, %v453
        %v455 = vand.u32 %v304, 4294901760
        %456 = vmatmul.f32.gmra.mxu0 %v455
        %v457 = vpop.f32.mrf.mxu0
        %v458 = vadd.f32 %v353, %v457
        %v459 = vand.u32 %v305, 4294901760
        %460 = vmatmul.f32.gmra.mxu0 %v459
        %v461 = vpop.f32.mrf.mxu0
        %v462 = vadd.f32 %v361, %v461
        %463 = vdwg.mxu0
        %v464 = vsub.f32 %v300, %v300
        %465 = vmatpush.msra.mxu0 %v464
        %v466 = vsub.f32 %v299, %v299
        %467 = vmatpush.msra.mxu0 %v466
        %v468 = vsub.f32 %v298, %v298
        %469 = vmatpush.msra.mxu0 %v468
        %v470 = vsub.f32 %v297, %v297
        %471 = vmatpush.msra.mxu0 %v470
        %v472 = vsub.f32 %v296, %v296
        %473 = vmatpush.msra.mxu0 %v472
        %v474 = vsub.f32 %v295, %v295
        %475 = vmatpush.msra.mxu0 %v474
        %v476 = vsub.f32 %v294, %v294
        %477 = vmatpush.msra.mxu0 %v476
        %v478 = vsub.f32 %v293, %v293
        %479 = vmatpush.msra.mxu0 %v478
        %v480 = vsub.f32 %v292, %v292
        %481 = vmatpush.msra.mxu0 %v480
        %v482 = vsub.f32 %v291, %v291
        %483 = vmatpush.msra.mxu0 %v482
        %v484 = vsub.f32 %v290, %v290
        %485 = vmatpush.msra.mxu0 %v484
        %v486 = vsub.f32 %v289, %v289
        %487 = vmatpush.msra.mxu0 %v486
        %v488 = vsub.f32 %v288, %v288
        %489 = vmatpush.msra.mxu0 %v488
        %v490 = vsub.f32 %v287, %v287
        %491 = vmatpush.msra.mxu0 %v490
        %v492 = vsub.f32 %v286, %v286
        %493 = vmatpush.msra.mxu0 %v492
        %v494 = vsub.f32 %v285, %v285
        %495 = vmatpush.msra.mxu0 %v494
        %v496 = vand.u32 %v301, 4294901760
        %v497 = vsub.f32 %v301, %v496
        %498 = vmatmul.f32.gmra.mxu0 %v497
        %v499 = vpop.f32.mrf.mxu0
        %v500 = vadd.f32 %v446, %v499
        %v501 = vand.u32 %v302, 4294901760
        %v502 = vsub.f32 %v302, %v501
        %503 = vmatmul.f32.gmra.mxu0 %v502
        %v504 = vpop.f32.mrf.mxu0
        %v505 = vadd.f32 %v450, %v504
        %v506 = vand.u32 %v303, 4294901760
        %v507 = vsub.f32 %v303, %v506
        %508 = vmatmul.f32.gmra.mxu0 %v507
        %v509 = vpop.f32.mrf.mxu0
        %v510 = vadd.f32 %v454, %v509
        %v511 = vand.u32 %v304, 4294901760
        %v512 = vsub.f32 %v304, %v511
        %513 = vmatmul.f32.gmra.mxu0 %v512
        %v514 = vpop.f32.mrf.mxu0
        %v515 = vadd.f32 %v458, %v514
        %v516 = vand.u32 %v305, 4294901760
        %v517 = vsub.f32 %v305, %v516
        %518 = vmatmul.f32.gmra.mxu0 %v517
        %v519 = vpop.f32.mrf.mxu0
        %v520 = vadd.f32 %v462, %v519
        %521 = vdwg.mxu0
        %522 = vmatpush.msra.mxu0 %v300
        %523 = vmatpush.msra.mxu0 %v299
        %524 = vmatpush.msra.mxu0 %v298
        %525 = vmatpush.msra.mxu0 %v297
        %526 = vmatpush.msra.mxu0 %v296
        %527 = vmatpush.msra.mxu0 %v295
        %528 = vmatpush.msra.mxu0 %v294
        %529 = vmatpush.msra.mxu0 %v293
        %530 = vmatpush.msra.mxu0 %v292
        %531 = vmatpush.msra.mxu0 %v291
        %532 = vmatpush.msra.mxu0 %v290
        %533 = vmatpush.msra.mxu0 %v289
        %534 = vmatpush.msra.mxu0 %v288
        %535 = vmatpush.msra.mxu0 %v287
        %536 = vmatpush.msra.mxu0 %v286
        %537 = vmatpush.msra.mxu0 %v285
        %v538 = vand.u32 %v301, 4294901760
        %v539 = vsub.f32 %v301, %v538
        %v540 = vand.u32 %v539, 4294901760
        %541 = vmatmul.f32.gmra.mxu0 %v540
        %v542 = vpop.f32.mrf.mxu0
        %v543 = vadd.f32 %v500, %v542
        %v544 = vand.u32 %v302, 4294901760
        %v545 = vsub.f32 %v302, %v544
        %v546 = vand.u32 %v545, 4294901760
        %547 = vmatmul.f32.gmra.mxu0 %v546
        %v548 = vpop.f32.mrf.mxu0
        %v549 = vadd.f32 %v505, %v548
        %v550 = vand.u32 %v303, 4294901760
        %v551 = vsub.f32 %v303, %v550
        %v552 = vand.u32 %v551, 4294901760
        %553 = vmatmul.f32.gmra.mxu0 %v552
        %v554 = vpop.f32.mrf.mxu0
        %v555 = vadd.f32 %v510, %v554
        %v556 = vand.u32 %v304, 4294901760
        %v557 = vsub.f32 %v304, %v556
        %v558 = vand.u32 %v557, 4294901760
        %559 = vmatmul.f32.gmra.mxu0 %v558
        %v560 = vpop.f32.mrf.mxu0
        %v561 = vadd.f32 %v515, %v560
        %v562 = vand.u32 %v305, 4294901760
        %v563 = vsub.f32 %v305, %v562
        %v564 = vand.u32 %v563, 4294901760
        %565 = vmatmul.f32.gmra.mxu0 %v564
        %v566 = vpop.f32.mrf.mxu0
        %v567 = vadd.f32 %v520, %v566
        %568 = vdwg.mxu0
        %v569 = vsub.f32 %v300, %v300
        %v570 = vand.u32 %v569, 4294901760
        %571 = vmatpush.msra.mxu0 %v570
        %v572 = vsub.f32 %v299, %v299
        %v573 = vand.u32 %v572, 4294901760
        %574 = vmatpush.msra.mxu0 %v573
        %v575 = vsub.f32 %v298, %v298
        %v576 = vand.u32 %v575, 4294901760
        %577 = vmatpush.msra.mxu0 %v576
        %v578 = vsub.f32 %v297, %v297
        %v579 = vand.u32 %v578, 4294901760
        %580 = vmatpush.msra.mxu0 %v579
        %v581 = vsub.f32 %v296, %v296
        %v582 = vand.u32 %v581, 4294901760
        %583 = vmatpush.msra.mxu0 %v582
        %v584 = vsub.f32 %v295, %v295
        %v585 = vand.u32 %v584, 4294901760
        %586 = vmatpush.msra.mxu0 %v585
        %v587 = vsub.f32 %v294, %v294
        %v588 = vand.u32 %v587, 4294901760
        %589 = vmatpush.msra.mxu0 %v588
        %v590 = vsub.f32 %v293, %v293
        %v591 = vand.u32 %v590, 4294901760
        %592 = vmatpush.msra.mxu0 %v591
        %v593 = vsub.f32 %v292, %v292
        %v594 = vand.u32 %v593, 4294901760
        %595 = vmatpush.msra.mxu0 %v594
        %v596 = vsub.f32 %v291, %v291
        %v597 = vand.u32 %v596, 4294901760
        %598 = vmatpush.msra.mxu0 %v597
        %v599 = vsub.f32 %v290, %v290
        %v600 = vand.u32 %v599, 4294901760
        %601 = vmatpush.msra.mxu0 %v600
        %v602 = vsub.f32 %v289, %v289
        %v603 = vand.u32 %v602, 4294901760
        %604 = vmatpush.msra.mxu0 %v603
        %v605 = vsub.f32 %v288, %v288
        %v606 = vand.u32 %v605, 4294901760
        %607 = vmatpush.msra.mxu0 %v606
        %v608 = vsub.f32 %v287, %v287
        %v609 = vand.u32 %v608, 4294901760
        %610 = vmatpush.msra.mxu0 %v609
        %v611 = vsub.f32 %v286, %v286
        %v612 = vand.u32 %v611, 4294901760
        %613 = vmatpush.msra.mxu0 %v612
        %v614 = vsub.f32 %v285, %v285
        %v615 = vand.u32 %v614, 4294901760
        %616 = vmatpush.msra.mxu0 %v615
        %v617 = vand.u32 %v301, 4294901760
        %618 = vmatmul.f32.gmra.mxu0 %v617
        %v619 = vpop.f32.mrf.mxu0
        %v620 = vadd.f32 %v543, %v619
        %v621 = vand.u32 %v302, 4294901760
        %622 = vmatmul.f32.gmra.mxu0 %v621
        %v623 = vpop.f32.mrf.mxu0
        %v624 = vadd.f32 %v549, %v623
        %v625 = vand.u32 %v303, 4294901760
        %626 = vmatmul.f32.gmra.mxu0 %v625
        %v627 = vpop.f32.mrf.mxu0
        %v628 = vadd.f32 %v555, %v627
        %v629 = vand.u32 %v304, 4294901760
        %630 = vmatmul.f32.gmra.mxu0 %v629
        %v631 = vpop.f32.mrf.mxu0
        %v632 = vadd.f32 %v561, %v631
        %v633 = vand.u32 %v305, 4294901760
        %634 = vmatmul.f32.gmra.mxu0 %v633
        %v635 = vpop.f32.mrf.mxu0
        %v636 = vadd.f32 %v567, %v635
        %637 = vdwg.mxu0
        %638 = vmatpush.msra.mxu0 %v300
        %639 = vmatpush.msra.mxu0 %v299
        %640 = vmatpush.msra.mxu0 %v298
        %641 = vmatpush.msra.mxu0 %v297
        %642 = vmatpush.msra.mxu0 %v296
        %643 = vmatpush.msra.mxu0 %v295
        %644 = vmatpush.msra.mxu0 %v294
        %645 = vmatpush.msra.mxu0 %v293
        %646 = vmatpush.msra.mxu0 %v292
        %647 = vmatpush.msra.mxu0 %v291
        %648 = vmatpush.msra.mxu0 %v290
        %649 = vmatpush.msra.mxu0 %v289
        %650 = vmatpush.msra.mxu0 %v288
        %651 = vmatpush.msra.mxu0 %v287
        %652 = vmatpush.msra.mxu0 %v286
        %653 = vmatpush.msra.mxu0 %v285
        %v654 = vand.u32 %v301, 4294901760
        %655 = vmatmul.f32.gmra.mxu0 %v654
        %v656 = vpop.f32.mrf.mxu0
        %v657 = vadd.f32 %v620, %v656
        %v658 = vand.u32 %v302, 4294901760
        %659 = vmatmul.f32.gmra.mxu0 %v658
        %v660 = vpop.f32.mrf.mxu0
        %v661 = vadd.f32 %v624, %v660
        %v662 = vand.u32 %v303, 4294901760
        %663 = vmatmul.f32.gmra.mxu0 %v662
        %v664 = vpop.f32.mrf.mxu0
        %v665 = vadd.f32 %v628, %v664
        %v666 = vand.u32 %v304, 4294901760
        %667 = vmatmul.f32.gmra.mxu0 %v666
        %v668 = vpop.f32.mrf.mxu0
        %v669 = vadd.f32 %v632, %v668
        %v670 = vand.u32 %v305, 4294901760
        %671 = vmatmul.f32.gmra.mxu0 %v670
        %v672 = vpop.f32.mrf.mxu0
        %v673 = vadd.f32 %v636, %v672
        %674 = vdwg.mxu0
        %v675 = vperm.slane %v249, 0
        %vm676 = vcmp.eq.s32.totalorder %v252, %v675
        %vm677 = vcmp.eq.s32.totalorder %v253, %v675
        %vm678 = vcmp.eq.s32.totalorder %v254, %v675
        %vm679 = vcmp.eq.s32.totalorder %v255, %v675
        %vm680 = vcmp.eq.s32.totalorder %v256, %v675
        %vm681 = vcmp.eq.s32.totalorder %v257, %v675
        %vm682 = vcmp.eq.s32.totalorder %v258, %v675
        %vm683 = vcmp.eq.s32.totalorder %v259, %v675
        %vm684 = vcmp.eq.s32.totalorder %v260, %v675
        %vm685 = vcmp.eq.s32.totalorder %v261, %v675
        %vm686 = vcmp.eq.s32.totalorder %v262, %v675
        %vm687 = vcmp.eq.s32.totalorder %v263, %v675
        %vm688 = vcmp.eq.s32.totalorder %v264, %v675
        %vm689 = vcmp.eq.s32.totalorder %v265, %v675
        %vm690 = vcmp.eq.s32.totalorder %v266, %v675
        %vm691 = vcmp.eq.s32.totalorder %v267, %v675
        %v692 = vperm.slane %v250, 0
        %vm693 = vcmp.eq.s32.totalorder %v252, %v692
        %vm694 = vcmp.eq.s32.totalorder %v253, %v692
        %vm695 = vcmp.eq.s32.totalorder %v254, %v692
        %vm696 = vcmp.eq.s32.totalorder %v255, %v692
        %vm697 = vcmp.eq.s32.totalorder %v256, %v692
        %vm698 = vcmp.eq.s32.totalorder %v257, %v692
        %vm699 = vcmp.eq.s32.totalorder %v258, %v692
        %vm700 = vcmp.eq.s32.totalorder %v259, %v692
        %vm701 = vcmp.eq.s32.totalorder %v260, %v692
        %vm702 = vcmp.eq.s32.totalorder %v261, %v692
        %vm703 = vcmp.eq.s32.totalorder %v262, %v692
        %vm704 = vcmp.eq.s32.totalorder %v263, %v692
        %vm705 = vcmp.eq.s32.totalorder %v264, %v692
        %vm706 = vcmp.eq.s32.totalorder %v265, %v692
        %vm707 = vcmp.eq.s32.totalorder %v266, %v692
        %vm708 = vcmp.eq.s32.totalorder %v267, %v692
        %vm709 = vmor %vm676, %vm693
        %vm710 = vmor %vm677, %vm694
        %vm711 = vmor %vm678, %vm695
        %vm712 = vmor %vm679, %vm696
        %vm713 = vmor %vm680, %vm697
        %vm714 = vmor %vm681, %vm698
        %vm715 = vmor %vm682, %vm699
        %vm716 = vmor %vm683, %vm700
        %vm717 = vmor %vm684, %vm701
        %vm718 = vmor %vm685, %vm702
        %vm719 = vmor %vm686, %vm703
        %vm720 = vmor %vm687, %vm704
        %vm721 = vmor %vm688, %vm705
        %vm722 = vmor %vm689, %vm706
        %vm723 = vmor %vm690, %vm707
        %vm724 = vmor %vm691, %vm708
        %v725 = vsel %vm709, 1.0, 0.0
        %v726 = vsel %vm710, 1.0, 0.0
        %v727 = vsel %vm711, 1.0, 0.0
        %v728 = vsel %vm712, 1.0, 0.0
        %v729 = vsel %vm713, 1.0, 0.0
        %v730 = vsel %vm714, 1.0, 0.0
        %v731 = vsel %vm715, 1.0, 0.0
        %v732 = vsel %vm716, 1.0, 0.0
        %v733 = vsel %vm717, 1.0, 0.0
        %v734 = vsel %vm718, 1.0, 0.0
        %v735 = vsel %vm719, 1.0, 0.0
        %v736 = vsel %vm720, 1.0, 0.0
        %v737 = vsel %vm721, 1.0, 0.0
        %v738 = vsel %vm722, 1.0, 0.0
        %v739 = vsel %vm723, 1.0, 0.0
        %v740 = vsel %vm724, 1.0, 0.0
        %v741 = vld [vmem:[#allocation8] sm:$0xff]
        %v742 = vld [vmem:[#allocation8 + $0x8] sm:$0xff]
        %v743 = vld [vmem:[#allocation8 + $0x10] sm:$0xff]
        %v744 = vld [vmem:[#allocation8 + $0x18] sm:$0xff]
        %v745 = vld [vmem:[#allocation8 + $0x20] sm:$0xff]
        %746 = vmatpush.msra.mxu0 %v740
        %747 = vmatpush.msra.mxu0 %v739
        %748 = vmatpush.msra.mxu0 %v738
        %749 = vmatpush.msra.mxu0 %v737
        %750 = vmatpush.msra.mxu0 %v736
        %751 = vmatpush.msra.mxu0 %v735
        %752 = vmatpush.msra.mxu0 %v734
        %753 = vmatpush.msra.mxu0 %v733
        %754 = vmatpush.msra.mxu0 %v732
        %755 = vmatpush.msra.mxu0 %v731
        %756 = vmatpush.msra.mxu0 %v730
        %757 = vmatpush.msra.mxu0 %v729
        %758 = vmatpush.msra.mxu0 %v728
        %759 = vmatpush.msra.mxu0 %v727
        %760 = vmatpush.msra.mxu0 %v726
        %761 = vmatpush.msra.mxu0 %v725
        %v762 = vand.u32 %v741, 4294901760
        %v763 = vsub.f32 %v741, %v762
        %v764 = vand.u32 %v763, 4294901760
        %v765 = vsub.f32 %v763, %v764
        %v766 = vand.u32 %v765, 4294901760
        %767 = vmatmul.f32.gmra.mxu0 %v766
        %v768 = vpop.f32.mrf.mxu0
        %v769 = vadd.f32 0.0, %v768
        %v770 = vand.u32 %v742, 4294901760
        %v771 = vsub.f32 %v742, %v770
        %v772 = vand.u32 %v771, 4294901760
        %v773 = vsub.f32 %v771, %v772
        %v774 = vand.u32 %v773, 4294901760
        %775 = vmatmul.f32.gmra.mxu0 %v774
        %v776 = vpop.f32.mrf.mxu0
        %v777 = vadd.f32 0.0, %v776
        %v778 = vand.u32 %v743, 4294901760
        %v779 = vsub.f32 %v743, %v778
        %v780 = vand.u32 %v779, 4294901760
        %v781 = vsub.f32 %v779, %v780
        %v782 = vand.u32 %v781, 4294901760
        %783 = vmatmul.f32.gmra.mxu0 %v782
        %v784 = vpop.f32.mrf.mxu0
        %v785 = vadd.f32 0.0, %v784
        %v786 = vand.u32 %v744, 4294901760
        %v787 = vsub.f32 %v744, %v786
        %v788 = vand.u32 %v787, 4294901760
        %v789 = vsub.f32 %v787, %v788
        %v790 = vand.u32 %v789, 4294901760
        %791 = vmatmul.f32.gmra.mxu0 %v790
        %v792 = vpop.f32.mrf.mxu0
        %v793 = vadd.f32 0.0, %v792
        %v794 = vand.u32 %v745, 4294901760
        %v795 = vsub.f32 %v745, %v794
        %v796 = vand.u32 %v795, 4294901760
        %v797 = vsub.f32 %v795, %v796
        %v798 = vand.u32 %v797, 4294901760
        %799 = vmatmul.f32.gmra.mxu0 %v798
        %v800 = vpop.f32.mrf.mxu0
        %v801 = vadd.f32 0.0, %v800
        %802 = vdwg.mxu0
        %v803 = vsub.f32 %v740, %v740
        %v804 = vand.u32 %v803, 4294901760
        %v805 = vsub.f32 %v803, %v804
        %v806 = vand.u32 %v805, 4294901760
        %807 = vmatpush.msra.mxu0 %v806
        %v808 = vsub.f32 %v739, %v739
        %v809 = vand.u32 %v808, 4294901760
        %v810 = vsub.f32 %v808, %v809
        %v811 = vand.u32 %v810, 4294901760
        %812 = vmatpush.msra.mxu0 %v811
        %v813 = vsub.f32 %v738, %v738
        %v814 = vand.u32 %v813, 4294901760
        %v815 = vsub.f32 %v813, %v814
        %v816 = vand.u32 %v815, 4294901760
        %817 = vmatpush.msra.mxu0 %v816
        %v818 = vsub.f32 %v737, %v737
        %v819 = vand.u32 %v818, 4294901760
        %v820 = vsub.f32 %v818, %v819
        %v821 = vand.u32 %v820, 4294901760
        %822 = vmatpush.msra.mxu0 %v821
        %v823 = vsub.f32 %v736, %v736
        %v824 = vand.u32 %v823, 4294901760
        %v825 = vsub.f32 %v823, %v824
        %v826 = vand.u32 %v825, 4294901760
        %827 = vmatpush.msra.mxu0 %v826
        %v828 = vsub.f32 %v735, %v735
        %v829 = vand.u32 %v828, 4294901760
        %v830 = vsub.f32 %v828, %v829
        %v831 = vand.u32 %v830, 4294901760
        %832 = vmatpush.msra.mxu0 %v831
        %v833 = vsub.f32 %v734, %v734
        %v834 = vand.u32 %v833, 4294901760
        %v835 = vsub.f32 %v833, %v834
        %v836 = vand.u32 %v835, 4294901760
        %837 = vmatpush.msra.mxu0 %v836
        %v838 = vsub.f32 %v733, %v733
        %v839 = vand.u32 %v838, 4294901760
        %v840 = vsub.f32 %v838, %v839
        %v841 = vand.u32 %v840, 4294901760
        %842 = vmatpush.msra.mxu0 %v841
        %v843 = vsub.f32 %v732, %v732
        %v844 = vand.u32 %v843, 4294901760
        %v845 = vsub.f32 %v843, %v844
        %v846 = vand.u32 %v845, 4294901760
        %847 = vmatpush.msra.mxu0 %v846
        %v848 = vsub.f32 %v731, %v731
        %v849 = vand.u32 %v848, 4294901760
        %v850 = vsub.f32 %v848, %v849
        %v851 = vand.u32 %v850, 4294901760
        %852 = vmatpush.msra.mxu0 %v851
        %v853 = vsub.f32 %v730, %v730
        %v854 = vand.u32 %v853, 4294901760
        %v855 = vsub.f32 %v853, %v854
        %v856 = vand.u32 %v855, 4294901760
        %857 = vmatpush.msra.mxu0 %v856
        %v858 = vsub.f32 %v729, %v729
        %v859 = vand.u32 %v858, 4294901760
        %v860 = vsub.f32 %v858, %v859
        %v861 = vand.u32 %v860, 4294901760
        %862 = vmatpush.msra.mxu0 %v861
        %v863 = vsub.f32 %v728, %v728
        %v864 = vand.u32 %v863, 4294901760
        %v865 = vsub.f32 %v863, %v864
        %v866 = vand.u32 %v865, 4294901760
        %867 = vmatpush.msra.mxu0 %v866
        %v868 = vsub.f32 %v727, %v727
        %v869 = vand.u32 %v868, 4294901760
        %v870 = vsub.f32 %v868, %v869
        %v871 = vand.u32 %v870, 4294901760
        %872 = vmatpush.msra.mxu0 %v871
        %v873 = vsub.f32 %v726, %v726
        %v874 = vand.u32 %v873, 4294901760
        %v875 = vsub.f32 %v873, %v874
        %v876 = vand.u32 %v875, 4294901760
        %877 = vmatpush.msra.mxu0 %v876
        %v878 = vsub.f32 %v725, %v725
        %v879 = vand.u32 %v878, 4294901760
        %v880 = vsub.f32 %v878, %v879
        %v881 = vand.u32 %v880, 4294901760
        %882 = vmatpush.msra.mxu0 %v881
        %v883 = vand.u32 %v741, 4294901760
        %884 = vmatmul.f32.gmra.mxu0 %v883
        %v885 = vpop.f32.mrf.mxu0
        %v886 = vadd.f32 %v769, %v885
        %v887 = vand.u32 %v742, 4294901760
        %888 = vmatmul.f32.gmra.mxu0 %v887
        %v889 = vpop.f32.mrf.mxu0
        %v890 = vadd.f32 %v777, %v889
        %v891 = vand.u32 %v743, 4294901760
        %892 = vmatmul.f32.gmra.mxu0 %v891
        %v893 = vpop.f32.mrf.mxu0
        %v894 = vadd.f32 %v785, %v893
        %v895 = vand.u32 %v744, 4294901760
        %896 = vmatmul.f32.gmra.mxu0 %v895
        %v897 = vpop.f32.mrf.mxu0
        %v898 = vadd.f32 %v793, %v897
        %v899 = vand.u32 %v745, 4294901760
        %900 = vmatmul.f32.gmra.mxu0 %v899
        %v901 = vpop.f32.mrf.mxu0
        %v902 = vadd.f32 %v801, %v901
        %903 = vdwg.mxu0
        %v904 = vsub.f32 %v740, %v740
        %905 = vmatpush.msra.mxu0 %v904
        %v906 = vsub.f32 %v739, %v739
        %907 = vmatpush.msra.mxu0 %v906
        %v908 = vsub.f32 %v738, %v738
        %909 = vmatpush.msra.mxu0 %v908
        %v910 = vsub.f32 %v737, %v737
        %911 = vmatpush.msra.mxu0 %v910
        %v912 = vsub.f32 %v736, %v736
        %913 = vmatpush.msra.mxu0 %v912
        %v914 = vsub.f32 %v735, %v735
        %915 = vmatpush.msra.mxu0 %v914
        %v916 = vsub.f32 %v734, %v734
        %917 = vmatpush.msra.mxu0 %v916
        %v918 = vsub.f32 %v733, %v733
        %919 = vmatpush.msra.mxu0 %v918
        %v920 = vsub.f32 %v732, %v732
        %921 = vmatpush.msra.mxu0 %v920
        %v922 = vsub.f32 %v731, %v731
        %923 = vmatpush.msra.mxu0 %v922
        %v924 = vsub.f32 %v730, %v730
        %925 = vmatpush.msra.mxu0 %v924
        %v926 = vsub.f32 %v729, %v729
        %927 = vmatpush.msra.mxu0 %v926
        %v928 = vsub.f32 %v728, %v728
        %929 = vmatpush.msra.mxu0 %v928
        %v930 = vsub.f32 %v727, %v727
        %931 = vmatpush.msra.mxu0 %v930
        %v932 = vsub.f32 %v726, %v726
        %933 = vmatpush.msra.mxu0 %v932
        %v934 = vsub.f32 %v725, %v725
        %935 = vmatpush.msra.mxu0 %v934
        %v936 = vand.u32 %v741, 4294901760
        %v937 = vsub.f32 %v741, %v936
        %938 = vmatmul.f32.gmra.mxu0 %v937
        %v939 = vpop.f32.mrf.mxu0
        %v940 = vadd.f32 %v886, %v939
        %v941 = vand.u32 %v742, 4294901760
        %v942 = vsub.f32 %v742, %v941
        %943 = vmatmul.f32.gmra.mxu0 %v942
        %v944 = vpop.f32.mrf.mxu0
        %v945 = vadd.f32 %v890, %v944
        %v946 = vand.u32 %v743, 4294901760
        %v947 = vsub.f32 %v743, %v946
        %948 = vmatmul.f32.gmra.mxu0 %v947
        %v949 = vpop.f32.mrf.mxu0
        %v950 = vadd.f32 %v894, %v949
        %v951 = vand.u32 %v744, 4294901760
        %v952 = vsub.f32 %v744, %v951
        %953 = vmatmul.f32.gmra.mxu0 %v952
        %v954 = vpop.f32.mrf.mxu0
        %v955 = vadd.f32 %v898, %v954
        %v956 = vand.u32 %v745, 4294901760
        %v957 = vsub.f32 %v745, %v956
        %958 = vmatmul.f32.gmra.mxu0 %v957
        %v959 = vpop.f32.mrf.mxu0
        %v960 = vadd.f32 %v902, %v959
        %961 = vdwg.mxu0
        %962 = vmatpush.msra.mxu0 %v740
        %963 = vmatpush.msra.mxu0 %v739
        %964 = vmatpush.msra.mxu0 %v738
        %965 = vmatpush.msra.mxu0 %v737
        %966 = vmatpush.msra.mxu0 %v736
        %967 = vmatpush.msra.mxu0 %v735
        %968 = vmatpush.msra.mxu0 %v734
        %969 = vmatpush.msra.mxu0 %v733
        %970 = vmatpush.msra.mxu0 %v732
        %971 = vmatpush.msra.mxu0 %v731
        %972 = vmatpush.msra.mxu0 %v730
        %973 = vmatpush.msra.mxu0 %v729
        %974 = vmatpush.msra.mxu0 %v728
        %975 = vmatpush.msra.mxu0 %v727
        %976 = vmatpush.msra.mxu0 %v726
        %977 = vmatpush.msra.mxu0 %v725
        %v978 = vand.u32 %v741, 4294901760
        %v979 = vsub.f32 %v741, %v978
        %v980 = vand.u32 %v979, 4294901760
        %981 = vmatmul.f32.gmra.mxu0 %v980
        %v982 = vpop.f32.mrf.mxu0
        %v983 = vadd.f32 %v940, %v982
        %v984 = vand.u32 %v742, 4294901760
        %v985 = vsub.f32 %v742, %v984
        %v986 = vand.u32 %v985, 4294901760
        %987 = vmatmul.f32.gmra.mxu0 %v986
        %v988 = vpop.f32.mrf.mxu0
        %v989 = vadd.f32 %v945, %v988
        %v990 = vand.u32 %v743, 4294901760
        %v991 = vsub.f32 %v743, %v990
        %v992 = vand.u32 %v991, 4294901760
        %993 = vmatmul.f32.gmra.mxu0 %v992
        %v994 = vpop.f32.mrf.mxu0
        %v995 = vadd.f32 %v950, %v994
        %v996 = vand.u32 %v744, 4294901760
        %v997 = vsub.f32 %v744, %v996
        %v998 = vand.u32 %v997, 4294901760
        %999 = vmatmul.f32.gmra.mxu0 %v998
        %v1000 = vpop.f32.mrf.mxu0
        %v1001 = vadd.f32 %v955, %v1000
        %v1002 = vand.u32 %v745, 4294901760
        %v1003 = vsub.f32 %v745, %v1002
        %v1004 = vand.u32 %v1003, 4294901760
        %1005 = vmatmul.f32.gmra.mxu0 %v1004
        %v1006 = vpop.f32.mrf.mxu0
        %v1007 = vadd.f32 %v960, %v1006
        %1008 = vdwg.mxu0
        %v1009 = vsub.f32 %v740, %v740
        %v1010 = vand.u32 %v1009, 4294901760
        %1011 = vmatpush.msra.mxu0 %v1010
        %v1012 = vsub.f32 %v739, %v739
        %v1013 = vand.u32 %v1012, 4294901760
        %1014 = vmatpush.msra.mxu0 %v1013
        %v1015 = vsub.f32 %v738, %v738
        %v1016 = vand.u32 %v1015, 4294901760
        %1017 = vmatpush.msra.mxu0 %v1016
        %v1018 = vsub.f32 %v737, %v737
        %v1019 = vand.u32 %v1018, 4294901760
        %1020 = vmatpush.msra.mxu0 %v1019
        %v1021 = vsub.f32 %v736, %v736
        %v1022 = vand.u32 %v1021, 4294901760
        %1023 = vmatpush.msra.mxu0 %v1022
        %v1024 = vsub.f32 %v735, %v735
        %v1025 = vand.u32 %v1024, 4294901760
        %1026 = vmatpush.msra.mxu0 %v1025
        %v1027 = vsub.f32 %v734, %v734
        %v1028 = vand.u32 %v1027, 4294901760
        %1029 = vmatpush.msra.mxu0 %v1028
        %v1030 = vsub.f32 %v733, %v733
        %v1031 = vand.u32 %v1030, 4294901760
        %1032 = vmatpush.msra.mxu0 %v1031
        %v1033 = vsub.f32 %v732, %v732
        %v1034 = vand.u32 %v1033, 4294901760
        %1035 = vmatpush.msra.mxu0 %v1034
        %v1036 = vsub.f32 %v731, %v731
        %v1037 = vand.u32 %v1036, 4294901760
        %1038 = vmatpush.msra.mxu0 %v1037
        %v1039 = vsub.f32 %v730, %v730
        %v1040 = vand.u32 %v1039, 4294901760
        %1041 = vmatpush.msra.mxu0 %v1040
        %v1042 = vsub.f32 %v729, %v729
        %v1043 = vand.u32 %v1042, 4294901760
        %1044 = vmatpush.msra.mxu0 %v1043
        %v1045 = vsub.f32 %v728, %v728
        %v1046 = vand.u32 %v1045, 4294901760
        %1047 = vmatpush.msra.mxu0 %v1046
        %v1048 = vsub.f32 %v727, %v727
        %v1049 = vand.u32 %v1048, 4294901760
        %1050 = vmatpush.msra.mxu0 %v1049
        %v1051 = vsub.f32 %v726, %v726
        %v1052 = vand.u32 %v1051, 4294901760
        %1053 = vmatpush.msra.mxu0 %v1052
        %v1054 = vsub.f32 %v725, %v725
        %v1055 = vand.u32 %v1054, 4294901760
        %1056 = vmatpush.msra.mxu0 %v1055
        %v1057 = vand.u32 %v741, 4294901760
        %1058 = vmatmul.f32.gmra.mxu0 %v1057
        %v1059 = vpop.f32.mrf.mxu0
        %v1060 = vadd.f32 %v983, %v1059
        %v1061 = vand.u32 %v742, 4294901760
        %1062 = vmatmul.f32.gmra.mxu0 %v1061
        %v1063 = vpop.f32.mrf.mxu0
        %v1064 = vadd.f32 %v989, %v1063
        %v1065 = vand.u32 %v743, 4294901760
        %1066 = vmatmul.f32.gmra.mxu0 %v1065
        %v1067 = vpop.f32.mrf.mxu0
        %v1068 = vadd.f32 %v995, %v1067
        %v1069 = vand.u32 %v744, 4294901760
        %1070 = vmatmul.f32.gmra.mxu0 %v1069
        %v1071 = vpop.f32.mrf.mxu0
        %v1072 = vadd.f32 %v1001, %v1071
        %v1073 = vand.u32 %v745, 4294901760
        %1074 = vmatmul.f32.gmra.mxu0 %v1073
        %v1075 = vpop.f32.mrf.mxu0
        %v1076 = vadd.f32 %v1007, %v1075
        %1077 = vdwg.mxu0
        %1078 = vmatpush.msra.mxu0 %v740
        %1079 = vmatpush.msra.mxu0 %v739
        %1080 = vmatpush.msra.mxu0 %v738
        %1081 = vmatpush.msra.mxu0 %v737
        %1082 = vmatpush.msra.mxu0 %v736
        %1083 = vmatpush.msra.mxu0 %v735
        %1084 = vmatpush.msra.mxu0 %v734
        %1085 = vmatpush.msra.mxu0 %v733
        %1086 = vmatpush.msra.mxu0 %v732
        %1087 = vmatpush.msra.mxu0 %v731
        %1088 = vmatpush.msra.mxu0 %v730
        %1089 = vmatpush.msra.mxu0 %v729
        %1090 = vmatpush.msra.mxu0 %v728
        %1091 = vmatpush.msra.mxu0 %v727
        %1092 = vmatpush.msra.mxu0 %v726
        %1093 = vmatpush.msra.mxu0 %v725
        %v1094 = vand.u32 %v741, 4294901760
        %1095 = vmatmul.f32.gmra.mxu0 %v1094
        %v1096 = vpop.f32.mrf.mxu0
        %v1097 = vadd.f32 %v1060, %v1096
        %v1098 = vand.u32 %v742, 4294901760
        %1099 = vmatmul.f32.gmra.mxu0 %v1098
        %v1100 = vpop.f32.mrf.mxu0
        %v1101 = vadd.f32 %v1064, %v1100
        %v1102 = vand.u32 %v743, 4294901760
        %1103 = vmatmul.f32.gmra.mxu0 %v1102
        %v1104 = vpop.f32.mrf.mxu0
        %v1105 = vadd.f32 %v1068, %v1104
        %v1106 = vand.u32 %v744, 4294901760
        %1107 = vmatmul.f32.gmra.mxu0 %v1106
        %v1108 = vpop.f32.mrf.mxu0
        %v1109 = vadd.f32 %v1072, %v1108
        %v1110 = vand.u32 %v745, 4294901760
        %1111 = vmatmul.f32.gmra.mxu0 %v1110
        %v1112 = vpop.f32.mrf.mxu0
        %v1113 = vadd.f32 %v1076, %v1112
        %1114 = vdwg.mxu0
        %v1115 = vmul.f32 %v657, %v1097
        %v1116 = vmul.f32 %v661, %v1101
        %v1117 = vmul.f32 %v665, %v1105
        %v1118 = vmul.f32 %v669, %v1109
        %v1119 = vmul.f32 %v673, %v1113
        %v1120 = vadd.f32 %v1115, %v1116
        %v1121 = vadd.f32 %v1120, %v1117
        %v1122 = vadd.f32 %v1121, %v1118
        %v1123 = vadd.f32 %v1122, %v1119
        %v1124 = vrot.slane %v1123, 4
        %v1125 = vadd.f32 %v1123, %v1124
        %v1126 = vrot.slane %v1125, 2
        %v1127 = vadd.f32 %v1125, %v1126
        %v1128 = vrot.slane %v1127, 1
        %v1129 = vadd.f32 %v1127, %v1128
        %s1130 = sld [smem:[#allocation2]]
        %v1131 = vstv %s1130
        %v1132 = vadd.f32 %v1129, %v1131
        %1133 = vst [vmem:[%s247] sm:$0x1] %v1132
        %s1134 = sand.u32 %s120, 1
        %s1135 = scalar_lea.sflag [#allocation5], %s1134
        %s1136 = sand.u32 %s120, 1
        %s1137 = scalar_lea.vmem [#allocation9], %s1136
        // Predicated region
        $region49: #{tpu_custom_call.1} parent=35 // pred_check
          %p1138 = pneg %p130
        $region50: #{tpu_custom_call.1} parent=35 // pred_check_branch
          %1140 = sbr.rel (%p1138) target = $region52
        $region51: #{tpu_custom_call.1} parent=35 // pred_region
          %1142 = vsyncadd %s1135, 0
          %s1143 = scalar_lea.hbm %s4, %s23
          %s1145 = sshll.u32 %s1137, 4
          %s1146 = int_to_ptr.vmem [resolvable:$true] %s1145
          %s1147 = sshll.u32 %s1143, 4
          %s1148 = int_to_ptr.hbm [resolvable:$true] %s1147
          %1150 = dma.vmem_to_hbm [thread:$0]  %s1146, 16, %s1148, %s1135
        $region52: #{tpu_custom_call.1} parent=35 // pred_fallthru
          _
      $region36: #{tpu_custom_call.1} parent=5 // pred_fallthru
        _
      %p1151 = scmp.le.s32.totalorder 2, %s18
      // Predicated region
      $region53: #{tpu_custom_call.1} parent=5 // pred_check
        %p1152 = pneg %p1151
      $region54: #{tpu_custom_call.1} parent=5 // pred_check_branch
        %1154 = sbr.rel (%p1152) target = $region56
      $region55: #{tpu_custom_call.1} parent=5 // pred_region
        %s1155 = ssub.s32 %s18, 2
        // Predicated region
        $region57: #{tpu_custom_call.1} parent=55 // pred_check
          %p1156 = pneg %p136
        $region58: #{tpu_custom_call.1} parent=55 // pred_check_branch
          %1158 = sbr.rel (%p1156) target = $region60
        $region59: #{tpu_custom_call.1} parent=55 // pred_region
          %s1159 = sand.u32 %s121, 1
          %s1160 = scalar_lea.sflag [#allocation5], %s1159
          %s1161 = sand.u32 %s121, 1
          %s1162 = scalar_lea.vmem [#allocation9], %s1161
          %1164 = dma.done %s1160, 16
        $region60: #{tpu_custom_call.1} parent=55 // pred_fallthru
          _
      $region56: #{tpu_custom_call.1} parent=5 // pred_fallthru
        _
    $region6: #{tpu_custom_call.1} parent=1 // loop_footer
      %s22 = sadd.s32 1, %s18
    $region7: #{tpu_custom_call.1} parent=1 // loop_footer_branch
      %17 = sbr.rel target = $region3
    $region8: #{tpu_custom_call.1} parent=1 // loop_exit
      _
    %1165 = vsyncpa [#allocation4], 1
    %s1166 = scalar_lea.sflag [#allocation4], 1
    %1167 = vsyncpa %s1166, 1
    %1168 = vsyncpa [#allocation7], 1
    %1169 = vsyncpa [#allocation5], 1
    %s1170 = scalar_lea.sflag [#allocation5], 1
    %1171 = vsyncpa %s1170, 1

</llo_original>
